<compile_context>
chip_gen: v5e
topology: v5e:2x2
jax: 0.10.0
libtpu: 0.0.40
codegen_flags: <defaults>
</compile_context>

<pallas_src>
import functools

import jax
import jax.numpy as jnp
from jax import lax
from jax.experimental import pallas as pl
from jax.experimental.pallas import tpu as pltpu


def _pos2weight_kernel(x_ref, w1t_ref, b1_ref, w2t_ref, b2_ref, o_ref,
                       *, num_channels):
    xT = x_ref[...]                      # (3, tile_n)  f32, lane-dense
    w1t = w1t_ref[...]                   # (256, 3)     f32

    # Layer 1: Linear(3, 256) + ReLU as three broadcast FMAs on the VPU
    # (K=3 would leave the MXU nearly idle while still consuming vex slots).
    h = (w1t[:, 0:1] * xT[0:1, :]
         + w1t[:, 1:2] * xT[1:2, :]
         + w1t[:, 2:3] * xT[2:3, :]
         + b1_ref[...])                  # (256, tile_n)
    h = jnp.maximum(h, 0.0)

    # Layer 2: SuperLinear(256, 16) -> MXU matmul, bf16 operands, f32 accumulate.
    y = jnp.dot(w2t_ref[...], h.astype(jnp.bfloat16),
                preferred_element_type=jnp.float32)      # (16, tile_n)
    y = y + b2_ref[...]

    # Keep only the first num_channels output features: -inf => exp() = 0,
    # exactly reproducing "slice before softmax".
    row = lax.broadcasted_iota(jnp.int32, y.shape, 0)
    y = jnp.where(row < num_channels, y, -jnp.inf)

    # Numerically-stable softmax over the feature (sublane) axis.
    m = jnp.max(y, axis=0, keepdims=True)
    e = jnp.exp(y - m)
    s = jnp.sum(e, axis=0, keepdims=True)
    o_ref[...] = (e * pl.reciprocal(s, approx=True)).astype(o_ref.dtype)


def pos2weight_forward(x, params, num_channels, *, tile_n=512):
    """x: (N, 3) float32; returns (N, num_channels) softmax weights."""
    w1, b1, w2, b2 = params["w1"], params["b1"], params["w2"], params["b2"]
    N, in_f = x.shape
    hidden = w1.shape[1]          # 256
    out_full = w2.shape[1]        # 16
    assert 1 <= num_channels <= out_full

    # Lane-dense transposed layout: batch N goes on the lane (last) axis,
    # padded to a multiple of 128 (and of tile_n).  Padded columns produce
    # valid-but-unused softmax rows that are sliced off below.
    lane = 128
    tile_n = max(lane, (min(tile_n, pl.cdiv(N, lane) * lane) // lane) * lane)
    n_pad = pl.cdiv(N, tile_n) * tile_n
    xT = jnp.zeros((in_f, n_pad), jnp.float32).at[:, :N].set(x.T)

    w1t = w1.T.astype(jnp.float32)                    # (256, 3)   VPU path stays f32
    b1c = b1.reshape(hidden, 1).astype(jnp.float32)   # (256, 1)
    w2t = w2.T.astype(jnp.bfloat16)                   # (16, 256)  bf16 for the MXU
    b2c = b2.reshape(out_full, 1).astype(jnp.float32) # (16, 1)

    kernel = functools.partial(_pos2weight_kernel, num_channels=num_channels)

    # Note (v7x): for large N the grid naturally has >= 2 "parallel" steps so both
    # TensorCores get work; tiny N (as in the test below) runs in a single step.
    outT = pl.pallas_call(
        kernel,
        out_shape=jax.ShapeDtypeStruct((out_full, n_pad), jnp.float32),
        grid_spec=pltpu.PrefetchScalarGridSpec(
            num_scalar_prefetch=0,
            grid=(n_pad // tile_n,),
            in_specs=[
                pl.BlockSpec((in_f, tile_n), lambda i: (0, i)),     # x^T tile
                pl.BlockSpec((hidden, in_f), lambda i: (0, 0)),     # W1^T
                pl.BlockSpec((hidden, 1), lambda i: (0, 0)),        # b1
                pl.BlockSpec((out_full, hidden), lambda i: (0, 0)), # W2^T
                pl.BlockSpec((out_full, 1), lambda i: (0, 0)),      # b2
            ],
            out_specs=pl.BlockSpec((out_full, tile_n), lambda i: (0, i)),
        ),
        compiler_params=pltpu.CompilerParams(
            dimension_semantics=("parallel",)),
    )(xT, w1t, b1c, w2t, b2c)

    # Un-transpose + slice back to the module's (N, num_channels) output.
    # (A fused consumer could use outT[:num_channels, :N] directly and skip this.)
    return outT[:num_channels, :N].T


def init_params(key):
    """Deterministic synthetic parameters matching the module's __init__ shapes."""
    k1, k2, k3, k4 = jax.random.split(key, 4)
    # nn.Linear(3, 256)
    w1 = jax.random.normal(k1, (3, 256), jnp.float32) * 0.1
    b1 = jax.random.normal(k2, (256,), jnp.float32) * 0.01
    # SuperLinear(256, 16)
    w2 = jax.random.normal(k3, (256, 16), jnp.float32) * 0.05
    b2 = jax.random.normal(k4, (16,), jnp.float32) * 0.01
    return {"w1": w1, "b1": b1, "w2": w2, "b2": b2}


def _reference(x, params, num_channels):
    h = jnp.maximum(x @ params["w1"] + params["b1"], 0.0)
    y = h @ params["w2"] + params["b2"]
    y = y[:, :num_channels]
    return jax.nn.softmax(y, axis=1)


if __name__ == "__main__":
    key = jax.random.PRNGKey(0)
    kx, kp = jax.random.split(key)

    N = 16              # number of positional vectors
    num_channels = 12   # SuperLinear active output features (<= 16)
    x = jax.random.normal(kx, (N, 3), jnp.float32)
    params = init_params(kp)

    out = pos2weight_forward(x, params, num_channels)
    out = jax.block_until_ready(out)

    ref = _reference(x, params, num_channels)
    assert out.shape == (N, num_channels)
    # Tolerance accounts for bf16 MXU operands and approx reciprocal in softmax.
    assert jnp.allclose(out, ref, atol=3e-3, rtol=2e-2), "mismatch vs JAX reference"

    print("KERNEL_OK")
</pallas_src>

<mosaic_0001>
module attributes {stable_mosaic.version = 11 : i64} {
  func.func @_pos2weight_kernel(%arg0: i32, %arg1: memref<3x128xf32, #tpu.memory_space<vmem>>, %arg2: memref<256x3xf32, #tpu.memory_space<vmem>>, %arg3: memref<256x1xf32, #tpu.memory_space<vmem>>, %arg4: memref<16x256xbf16, #tpu.memory_space<vmem>>, %arg5: memref<16x1xf32, #tpu.memory_space<vmem>>, %arg6: memref<16x128xf32, #tpu.memory_space<vmem>>) attributes {dimension_semantics = [#tpu.dimension_semantics<parallel>], iteration_bounds = array<i64: 1>, scalar_prefetch = 0 : i64, scratch_operands = 0 : i64, tpu.core_type = #tpu.core_type<tc>, window_params = [{transform_indices = @transform_0, window_bounds = array<i64: 3, 128>}, {pipeline_mode = #tpu.pipeline_mode<synchronous>, transform_indices = @transform_1, window_bounds = array<i64: 256, 3>}, {pipeline_mode = #tpu.pipeline_mode<synchronous>, transform_indices = @transform_2, window_bounds = array<i64: 256, 1>}, {pipeline_mode = #tpu.pipeline_mode<synchronous>, transform_indices = @transform_3, window_bounds = array<i64: 16, 256>}, {pipeline_mode = #tpu.pipeline_mode<synchronous>, transform_indices = @transform_4, window_bounds = array<i64: 16, 1>}, {transform_indices = @transform_5, window_bounds = array<i64: 16, 128>}]} {
    %c0 = arith.constant 0 : index
    %c0_0 = arith.constant 0 : index
    %0 = vector.load %arg1[%c0, %c0_0] : memref<3x128xf32, #tpu.memory_space<vmem>>, vector<3x128xf32>
    %c0_1 = arith.constant 0 : index
    %c0_2 = arith.constant 0 : index
    %1 = vector.load %arg2[%c0_1, %c0_2] : memref<256x3xf32, #tpu.memory_space<vmem>>, vector<256x3xf32>
    %2 = vector.extract_strided_slice %1 {offsets = [0, 0], sizes = [256, 1], strides = [1, 1]} : vector<256x3xf32> to vector<256x1xf32>
    %3 = vector.extract_strided_slice %0 {offsets = [0, 0], sizes = [1, 128], strides = [1, 1]} : vector<3x128xf32> to vector<1x128xf32>
    %4 = vector.broadcast %2 : vector<256x1xf32> to vector<256x128xf32>
    %5 = vector.broadcast %3 : vector<1x128xf32> to vector<256x128xf32>
    %6 = arith.mulf %4, %5 : vector<256x128xf32>
    %7 = vector.extract_strided_slice %1 {offsets = [0, 1], sizes = [256, 1], strides = [1, 1]} : vector<256x3xf32> to vector<256x1xf32>
    %8 = vector.extract_strided_slice %0 {offsets = [1, 0], sizes = [1, 128], strides = [1, 1]} : vector<3x128xf32> to vector<1x128xf32>
    %9 = vector.broadcast %7 : vector<256x1xf32> to vector<256x128xf32>
    %10 = vector.broadcast %8 : vector<1x128xf32> to vector<256x128xf32>
    %11 = arith.mulf %9, %10 : vector<256x128xf32>
    %12 = arith.addf %6, %11 : vector<256x128xf32>
    %13 = vector.extract_strided_slice %1 {offsets = [0, 2], sizes = [256, 1], strides = [1, 1]} : vector<256x3xf32> to vector<256x1xf32>
    %14 = vector.extract_strided_slice %0 {offsets = [2, 0], sizes = [1, 128], strides = [1, 1]} : vector<3x128xf32> to vector<1x128xf32>
    %15 = vector.broadcast %13 : vector<256x1xf32> to vector<256x128xf32>
    %16 = vector.broadcast %14 : vector<1x128xf32> to vector<256x128xf32>
    %17 = arith.mulf %15, %16 : vector<256x128xf32>
    %18 = arith.addf %12, %17 : vector<256x128xf32>
    %c0_3 = arith.constant 0 : index
    %c0_4 = arith.constant 0 : index
    %19 = vector.load %arg3[%c0_3, %c0_4] : memref<256x1xf32, #tpu.memory_space<vmem>>, vector<256x1xf32>
    %20 = vector.broadcast %19 : vector<256x1xf32> to vector<256x128xf32>
    %21 = arith.addf %18, %20 : vector<256x128xf32>
    %cst = arith.constant 0.000000e+00 : f32
    %22 = vector.broadcast %cst : f32 to vector<256x128xf32>
    %23 = arith.maximumf %21, %22 : vector<256x128xf32>
    %c0_5 = arith.constant 0 : index
    %c0_6 = arith.constant 0 : index
    %24 = vector.load %arg4[%c0_5, %c0_6] : memref<16x256xbf16, #tpu.memory_space<vmem>>, vector<16x256xbf16>
    %25 = arith.truncf %23 : vector<256x128xf32> to vector<256x128xbf16>
    %cst_7 = arith.constant dense<0.000000e+00> : vector<16x128xf32>
    %26 = tpu.matmul %24, %25, %cst_7 {dimension_numbers = #tpu.dot_dimension_numbers<[1], [0], [0], [1], [0, 0, 1, 1], [], []>} : vector<16x256xbf16>, vector<256x128xbf16>, vector<16x128xf32> -> vector<16x128xf32>
    %c0_8 = arith.constant 0 : index
    %c0_9 = arith.constant 0 : index
    %27 = vector.load %arg5[%c0_8, %c0_9] : memref<16x1xf32, #tpu.memory_space<vmem>>, vector<16x1xf32>
    %28 = vector.broadcast %27 : vector<16x1xf32> to vector<16x128xf32>
    %29 = arith.addf %26, %28 : vector<16x128xf32>
    %30 = tpu.iota {dimensions = array<i32: 0>} : vector<16x128xi32>
    %c12_i32 = arith.constant 12 : i32
    %31 = vector.broadcast %c12_i32 : i32 to vector<16x128xi32>
    %32 = arith.cmpi slt, %30, %31 : vector<16x128xi32>
    %cst_10 = arith.constant 0xFF800000 : f32
    %33 = vector.broadcast %cst_10 : f32 to vector<16x128xf32>
    %34 = arith.select %32, %29, %33 : vector<16x128xi1>, vector<16x128xf32>
    %cst_11 = arith.constant dense<0xFF800000> : vector<128xf32>
    %35 = vector.multi_reduction <maximumf>, %34, %cst_11 [0] : vector<16x128xf32> to vector<128xf32>
    %36 = vector.shape_cast %35 : vector<128xf32> to vector<1x128xf32>
    %37 = vector.broadcast %36 : vector<1x128xf32> to vector<16x128xf32>
    %38 = arith.subf %34, %37 : vector<16x128xf32>
    %39 = math.exp %38 : vector<16x128xf32>
    %cst_12 = arith.constant dense<0.000000e+00> : vector<128xf32>
    %40 = vector.multi_reduction <add>, %39, %cst_12 [0] : vector<16x128xf32> to vector<128xf32>
    %41 = vector.shape_cast %40 : vector<128xf32> to vector<1x128xf32>
    %42 = tpu.reciprocal %41 {approx = true} : vector<1x128xf32> -> vector<1x128xf32>
    %43 = vector.broadcast %42 : vector<1x128xf32> to vector<16x128xf32>
    %44 = arith.mulf %39, %43 : vector<16x128xf32>
    %c0_13 = arith.constant 0 : index
    %c0_14 = arith.constant 0 : index
    %45 = vector.load %arg6[%c0_13, %c0_14] : memref<16x128xf32, #tpu.memory_space<vmem>>, vector<16x128xf32>
    tpu.vector_store %arg6[%c0_13, %c0_14], %44 {strides = array<i32>} : memref<16x128xf32, #tpu.memory_space<vmem>>, vector<16x128xf32>,
    return
  }
  func.func @transform_0(%arg0: i32) -> (i32, i32) {
    %c0_i32 = arith.constant 0 : i32
    %c0_i32_0 = arith.constant 0 : i32
    return %c0_i32, %arg0 : i32, i32
  }
  func.func @transform_1(%arg0: i32) -> (i32, i32) {
    %c0_i32 = arith.constant 0 : i32
    %c0_i32_0 = arith.constant 0 : i32
    %c0_i32_1 = arith.constant 0 : i32
    return %c0_i32, %c0_i32_0 : i32, i32
  }
  func.func @transform_2(%arg0: i32) -> (i32, i32) {
    %c0_i32 = arith.constant 0 : i32
    %c0_i32_0 = arith.constant 0 : i32
    %c0_i32_1 = arith.constant 0 : i32
    return %c0_i32, %c0_i32_0 : i32, i32
  }
  func.func @transform_3(%arg0: i32) -> (i32, i32) {
    %c0_i32 = arith.constant 0 : i32
    %c0_i32_0 = arith.constant 0 : i32
    %c0_i32_1 = arith.constant 0 : i32
    return %c0_i32, %c0_i32_0 : i32, i32
  }
  func.func @transform_4(%arg0: i32) -> (i32, i32) {
    %c0_i32 = arith.constant 0 : i32
    %c0_i32_0 = arith.constant 0 : i32
    %c0_i32_1 = arith.constant 0 : i32
    return %c0_i32, %c0_i32_0 : i32, i32
  }
  func.func @transform_5(%arg0: i32) -> (i32, i32) {
    %c0_i32 = arith.constant 0 : i32
    %c0_i32_0 = arith.constant 0 : i32
    return %c0_i32, %arg0 : i32, i32
  }
}

</mosaic_0001>

<llo_original>
// kernel: tpu_custom_call.1
$region0: #{tpu_custom_call.1}
  #allocation0 [shape = 'u32[]', space=smem, size = 0x4, offset = 0x4, fixed_abs, tag = 'smem constant byte address 0x4 - core index']
  #allocation1 [shape = 'u32[72,128]{1,0:T(1,128)}', space=vmem, size = 0x9000, scoped, tag = 'internal scratch']
  %s0 = inlined_call_operand.vmem [shape: f32[3,128], index: 0, kind: input, shape index: {}]
  %s1 = inlined_call_operand.vmem [shape: f32[256,3], index: 1, kind: input, shape index: {}]
  %s2 = inlined_call_operand.vmem [shape: f32[256,1], index: 2, kind: input, shape index: {}]
  %s3 = inlined_call_operand.vmem [shape: bf16[16,256], index: 3, kind: input, shape index: {}]
  %s4 = inlined_call_operand.vmem [shape: f32[16,1], index: 4, kind: input, shape index: {}]
  %s5 = inlined_call_operand.hbm [shape: f32[16,128], index: 5, kind: output, shape index: {}]
  %s6 = sld [smem:[#allocation0]]
  $region30: #{tpu_custom_call.1} parent=0
    _
  %s8 = ssub.s32 1, %s6
  %s9 = scalar_select 0, %s8, %s6
  $region1: #{tpu_custom_call.1} parent=0
    #allocation2 [shape = 'u8[8192]{0}', space=vmem, size = 0x2000, scoped, tag = 'output window, operand 0, single buffered']
    #allocation3 [shape = 's32[1]{0}', space=sflag, size = 0x4, scoped, tag = 'scoped memory for tpu_custom_call.1']
    %10 = vsyncpa [#allocation3], 0
    // Predicated region
    $region2: #{tpu_custom_call.1} parent=1 // pred_check
      _
    $region3: #{tpu_custom_call.1} parent=1 // pred_check_branch
      %12 = sbr.rel (0) target = $region5
    $region4: #{tpu_custom_call.1} parent=1 // pred_region
      _
    $region5: #{tpu_custom_call.1} parent=1 // pred_fallthru
      _
    // Predicated region
    $region6: #{tpu_custom_call.1} parent=1 // pred_check
      _
    $region7: #{tpu_custom_call.1} parent=1 // pred_check_branch
      %14 = sbr.rel (0) target = $region9
    $region8: #{tpu_custom_call.1} parent=1 // pred_region
      _
    $region9: #{tpu_custom_call.1} parent=1 // pred_fallthru
      _
    // Predicated region
    $region10: #{tpu_custom_call.1} parent=1 // pred_check
      _
    $region11: #{tpu_custom_call.1} parent=1 // pred_check_branch
      %16 = sbr.rel (0) target = $region13
    $region12: #{tpu_custom_call.1} parent=1 // pred_region
      _
    $region13: #{tpu_custom_call.1} parent=1 // pred_fallthru
      _
    // Predicated region
    $region14: #{tpu_custom_call.1} parent=1 // pred_check
      _
    $region15: #{tpu_custom_call.1} parent=1 // pred_check_branch
      %18 = sbr.rel (0) target = $region17
    $region16: #{tpu_custom_call.1} parent=1 // pred_region
      _
    $region17: #{tpu_custom_call.1} parent=1 // pred_fallthru
      _
    // Predicated region
    $region18: #{tpu_custom_call.1} parent=1 // pred_check
      _
    $region19: #{tpu_custom_call.1} parent=1 // pred_check_branch
      %20 = sbr.rel (0) target = $region21
    $region20: #{tpu_custom_call.1} parent=1 // pred_region
      _
    $region21: #{tpu_custom_call.1} parent=1 // pred_fallthru
      _
    %v21 = vld [vmem:[%s0] sm:$0x7]
    %v22 = vld [vmem:[%s1] sm:$0xff]
    %v23 = vld [vmem:[%s1 + $0x8] sm:$0xff]
    %v24 = vld [vmem:[%s1 + $0x10] sm:$0xff]
    %v25 = vld [vmem:[%s1 + $0x18] sm:$0xff]
    %v26 = vld [vmem:[%s1 + $0x20] sm:$0xff]
    %v27 = vld [vmem:[%s1 + $0x28] sm:$0xff]
    %v28 = vld [vmem:[%s1 + $0x30] sm:$0xff]
    %v29 = vld [vmem:[%s1 + $0x38] sm:$0xff]
    %v30 = vld [vmem:[%s1 + $0x40] sm:$0xff]
    %v31 = vld [vmem:[%s1 + $0x48] sm:$0xff]
    %v32 = vld [vmem:[%s1 + $0x50] sm:$0xff]
    %v33 = vld [vmem:[%s1 + $0x58] sm:$0xff]
    %v34 = vld [vmem:[%s1 + $0x60] sm:$0xff]
    %v35 = vld [vmem:[%s1 + $0x68] sm:$0xff]
    %v36 = vld [vmem:[%s1 + $0x70] sm:$0xff]
    %v37 = vld [vmem:[%s1 + $0x78] sm:$0xff]
    %v38 = vld [vmem:[%s1 + $0x80] sm:$0xff]
    %v39 = vld [vmem:[%s1 + $0x88] sm:$0xff]
    %v40 = vld [vmem:[%s1 + $0x90] sm:$0xff]
    %v41 = vld [vmem:[%s1 + $0x98] sm:$0xff]
    %v42 = vld [vmem:[%s1 + $0xa0] sm:$0xff]
    %v43 = vld [vmem:[%s1 + $0xa8] sm:$0xff]
    %v44 = vld [vmem:[%s1 + $0xb0] sm:$0xff]
    %v45 = vld [vmem:[%s1 + $0xb8] sm:$0xff]
    %v46 = vld [vmem:[%s1 + $0xc0] sm:$0xff]
    %v47 = vld [vmem:[%s1 + $0xc8] sm:$0xff]
    %v48 = vld [vmem:[%s1 + $0xd0] sm:$0xff]
    %v49 = vld [vmem:[%s1 + $0xd8] sm:$0xff]
    %v50 = vld [vmem:[%s1 + $0xe0] sm:$0xff]
    %v51 = vld [vmem:[%s1 + $0xe8] sm:$0xff]
    %v52 = vld [vmem:[%s1 + $0xf0] sm:$0xff]
    %v53 = vld [vmem:[%s1 + $0xf8] sm:$0xff]
    %55 = vset.pattern.permute.xlu0 0
    %56 = vperm.xlu0 %55, %v22
    %v57 = vpop.permute.xlu0 %56
    %60 = vset.pattern.permute.xlu0 0
    %61 = vperm.xlu0 %60, %v23
    %v62 = vpop.permute.xlu0 %61
    %65 = vset.pattern.permute.xlu0 0
    %66 = vperm.xlu0 %65, %v24
    %v67 = vpop.permute.xlu0 %66
    %70 = vset.pattern.permute.xlu0 0
    %71 = vperm.xlu0 %70, %v25
    %v72 = vpop.permute.xlu0 %71
    %75 = vset.pattern.permute.xlu0 0
    %76 = vperm.xlu0 %75, %v26
    %v77 = vpop.permute.xlu0 %76
    %80 = vset.pattern.permute.xlu0 0
    %81 = vperm.xlu0 %80, %v27
    %v82 = vpop.permute.xlu0 %81
    %85 = vset.pattern.permute.xlu0 0
    %86 = vperm.xlu0 %85, %v28
    %v87 = vpop.permute.xlu0 %86
    %90 = vset.pattern.permute.xlu0 0
    %91 = vperm.xlu0 %90, %v29
    %v92 = vpop.permute.xlu0 %91
    %95 = vset.pattern.permute.xlu0 0
    %96 = vperm.xlu0 %95, %v30
    %v97 = vpop.permute.xlu0 %96
    %100 = vset.pattern.permute.xlu0 0
    %101 = vperm.xlu0 %100, %v31
    %v102 = vpop.permute.xlu0 %101
    %105 = vset.pattern.permute.xlu0 0
    %106 = vperm.xlu0 %105, %v32
    %v107 = vpop.permute.xlu0 %106
    %110 = vset.pattern.permute.xlu0 0
    %111 = vperm.xlu0 %110, %v33
    %v112 = vpop.permute.xlu0 %111
    %115 = vset.pattern.permute.xlu0 0
    %116 = vperm.xlu0 %115, %v34
    %v117 = vpop.permute.xlu0 %116
    %120 = vset.pattern.permute.xlu0 0
    %121 = vperm.xlu0 %120, %v35
    %v122 = vpop.permute.xlu0 %121
    %125 = vset.pattern.permute.xlu0 0
    %126 = vperm.xlu0 %125, %v36
    %v127 = vpop.permute.xlu0 %126
    %130 = vset.pattern.permute.xlu0 0
    %131 = vperm.xlu0 %130, %v37
    %v132 = vpop.permute.xlu0 %131
    %135 = vset.pattern.permute.xlu0 0
    %136 = vperm.xlu0 %135, %v38
    %v137 = vpop.permute.xlu0 %136
    %140 = vset.pattern.permute.xlu0 0
    %141 = vperm.xlu0 %140, %v39
    %v142 = vpop.permute.xlu0 %141
    %145 = vset.pattern.permute.xlu0 0
    %146 = vperm.xlu0 %145, %v40
    %v147 = vpop.permute.xlu0 %146
    %150 = vset.pattern.permute.xlu0 0
    %151 = vperm.xlu0 %150, %v41
    %v152 = vpop.permute.xlu0 %151
    %155 = vset.pattern.permute.xlu0 0
    %156 = vperm.xlu0 %155, %v42
    %v157 = vpop.permute.xlu0 %156
    %160 = vset.pattern.permute.xlu0 0
    %161 = vperm.xlu0 %160, %v43
    %v162 = vpop.permute.xlu0 %161
    %165 = vset.pattern.permute.xlu0 0
    %166 = vperm.xlu0 %165, %v44
    %v167 = vpop.permute.xlu0 %166
    %170 = vset.pattern.permute.xlu0 0
    %171 = vperm.xlu0 %170, %v45
    %v172 = vpop.permute.xlu0 %171
    %175 = vset.pattern.permute.xlu0 0
    %176 = vperm.xlu0 %175, %v46
    %v177 = vpop.permute.xlu0 %176
    %180 = vset.pattern.permute.xlu0 0
    %181 = vperm.xlu0 %180, %v47
    %v182 = vpop.permute.xlu0 %181
    %185 = vset.pattern.permute.xlu0 0
    %186 = vperm.xlu0 %185, %v48
    %v187 = vpop.permute.xlu0 %186
    %190 = vset.pattern.permute.xlu0 0
    %191 = vperm.xlu0 %190, %v49
    %v192 = vpop.permute.xlu0 %191
    %195 = vset.pattern.permute.xlu0 0
    %196 = vperm.xlu0 %195, %v50
    %v197 = vpop.permute.xlu0 %196
    %200 = vset.pattern.permute.xlu0 0
    %201 = vperm.xlu0 %200, %v51
    %v202 = vpop.permute.xlu0 %201
    %205 = vset.pattern.permute.xlu0 0
    %206 = vperm.xlu0 %205, %v52
    %v207 = vpop.permute.xlu0 %206
    %210 = vset.pattern.permute.xlu0 0
    %211 = vperm.xlu0 %210, %v53
    %v212 = vpop.permute.xlu0 %211
    %v214 = vperm.slane %v21, 0
    %v215 = vmul.f32 %v57, %v214
    %v216 = vmul.f32 %v62, %v214
    %v217 = vmul.f32 %v67, %v214
    %v218 = vmul.f32 %v72, %v214
    %v219 = vmul.f32 %v77, %v214
    %v220 = vmul.f32 %v82, %v214
    %v221 = vmul.f32 %v87, %v214
    %v222 = vmul.f32 %v92, %v214
    %v223 = vmul.f32 %v97, %v214
    %v224 = vmul.f32 %v102, %v214
    %v225 = vmul.f32 %v107, %v214
    %v226 = vmul.f32 %v112, %v214
    %v227 = vmul.f32 %v117, %v214
    %v228 = vmul.f32 %v122, %v214
    %v229 = vmul.f32 %v127, %v214
    %v230 = vmul.f32 %v132, %v214
    %v231 = vmul.f32 %v137, %v214
    %v232 = vmul.f32 %v142, %v214
    %v233 = vmul.f32 %v147, %v214
    %v234 = vmul.f32 %v152, %v214
    %v235 = vmul.f32 %v157, %v214
    %v236 = vmul.f32 %v162, %v214
    %v237 = vmul.f32 %v167, %v214
    %v238 = vmul.f32 %v172, %v214
    %v239 = vmul.f32 %v177, %v214
    %v240 = vmul.f32 %v182, %v214
    %v241 = vmul.f32 %v187, %v214
    %v242 = vmul.f32 %v192, %v214
    %v243 = vmul.f32 %v197, %v214
    %v244 = vmul.f32 %v202, %v214
    %v245 = vmul.f32 %v207, %v214
    %v246 = vmul.f32 %v212, %v214
    %247 = vset.pattern.permute.xlu0 1
    %248 = vperm.xlu0 %247, %v22
    %v249 = vpop.permute.xlu0 %248
    %251 = vset.pattern.permute.xlu0 1
    %252 = vperm.xlu0 %251, %v23
    %v253 = vpop.permute.xlu0 %252
    %255 = vset.pattern.permute.xlu0 1
    %256 = vperm.xlu0 %255, %v24
    %v257 = vpop.permute.xlu0 %256
    %259 = vset.pattern.permute.xlu0 1
    %260 = vperm.xlu0 %259, %v25
    %v261 = vpop.permute.xlu0 %260
    %263 = vset.pattern.permute.xlu0 1
    %264 = vperm.xlu0 %263, %v26
    %v265 = vpop.permute.xlu0 %264
    %267 = vset.pattern.permute.xlu0 1
    %268 = vperm.xlu0 %267, %v27
    %v269 = vpop.permute.xlu0 %268
    %271 = vset.pattern.permute.xlu0 1
    %272 = vperm.xlu0 %271, %v28
    %v273 = vpop.permute.xlu0 %272
    %275 = vset.pattern.permute.xlu0 1
    %276 = vperm.xlu0 %275, %v29
    %v277 = vpop.permute.xlu0 %276
    %279 = vset.pattern.permute.xlu0 1
    %280 = vperm.xlu0 %279, %v30
    %v281 = vpop.permute.xlu0 %280
    %283 = vset.pattern.permute.xlu0 1
    %284 = vperm.xlu0 %283, %v31
    %v285 = vpop.permute.xlu0 %284
    %287 = vset.pattern.permute.xlu0 1
    %288 = vperm.xlu0 %287, %v32
    %v289 = vpop.permute.xlu0 %288
    %291 = vset.pattern.permute.xlu0 1
    %292 = vperm.xlu0 %291, %v33
    %v293 = vpop.permute.xlu0 %292
    %295 = vset.pattern.permute.xlu0 1
    %296 = vperm.xlu0 %295, %v34
    %v297 = vpop.permute.xlu0 %296
    %299 = vset.pattern.permute.xlu0 1
    %300 = vperm.xlu0 %299, %v35
    %v301 = vpop.permute.xlu0 %300
    %303 = vset.pattern.permute.xlu0 1
    %304 = vperm.xlu0 %303, %v36
    %v305 = vpop.permute.xlu0 %304
    %307 = vset.pattern.permute.xlu0 1
    %308 = vperm.xlu0 %307, %v37
    %v309 = vpop.permute.xlu0 %308
    %311 = vset.pattern.permute.xlu0 1
    %312 = vperm.xlu0 %311, %v38
    %v313 = vpop.permute.xlu0 %312
    %315 = vset.pattern.permute.xlu0 1
    %316 = vperm.xlu0 %315, %v39
    %v317 = vpop.permute.xlu0 %316
    %319 = vset.pattern.permute.xlu0 1
    %320 = vperm.xlu0 %319, %v40
    %v321 = vpop.permute.xlu0 %320
    %323 = vset.pattern.permute.xlu0 1
    %324 = vperm.xlu0 %323, %v41
    %v325 = vpop.permute.xlu0 %324
    %327 = vset.pattern.permute.xlu0 1
    %328 = vperm.xlu0 %327, %v42
    %v329 = vpop.permute.xlu0 %328
    %331 = vset.pattern.permute.xlu0 1
    %332 = vperm.xlu0 %331, %v43
    %v333 = vpop.permute.xlu0 %332
    %335 = vset.pattern.permute.xlu0 1
    %336 = vperm.xlu0 %335, %v44
    %v337 = vpop.permute.xlu0 %336
    %339 = vset.pattern.permute.xlu0 1
    %340 = vperm.xlu0 %339, %v45
    %v341 = vpop.permute.xlu0 %340
    %343 = vset.pattern.permute.xlu0 1
    %344 = vperm.xlu0 %343, %v46
    %v345 = vpop.permute.xlu0 %344
    %347 = vset.pattern.permute.xlu0 1
    %348 = vperm.xlu0 %347, %v47
    %v349 = vpop.permute.xlu0 %348
    %351 = vset.pattern.permute.xlu0 1
    %352 = vperm.xlu0 %351, %v48
    %v353 = vpop.permute.xlu0 %352
    %355 = vset.pattern.permute.xlu0 1
    %356 = vperm.xlu0 %355, %v49
    %v357 = vpop.permute.xlu0 %356
    %359 = vset.pattern.permute.xlu0 1
    %360 = vperm.xlu0 %359, %v50
    %v361 = vpop.permute.xlu0 %360
    %363 = vset.pattern.permute.xlu0 1
    %364 = vperm.xlu0 %363, %v51
    %v365 = vpop.permute.xlu0 %364
    %367 = vset.pattern.permute.xlu0 1
    %368 = vperm.xlu0 %367, %v52
    %v369 = vpop.permute.xlu0 %368
    %371 = vset.pattern.permute.xlu0 1
    %372 = vperm.xlu0 %371, %v53
    %v373 = vpop.permute.xlu0 %372
    %v375 = vperm.slane %v21, 1
    %v376 = vmul.f32 %v249, %v375
    %v377 = vmul.f32 %v253, %v375
    %v378 = vmul.f32 %v257, %v375
    %v379 = vmul.f32 %v261, %v375
    %v380 = vmul.f32 %v265, %v375
    %v381 = vmul.f32 %v269, %v375
    %v382 = vmul.f32 %v273, %v375
    %v383 = vmul.f32 %v277, %v375
    %v384 = vmul.f32 %v281, %v375
    %v385 = vmul.f32 %v285, %v375
    %v386 = vmul.f32 %v289, %v375
    %v387 = vmul.f32 %v293, %v375
    %v388 = vmul.f32 %v297, %v375
    %v389 = vmul.f32 %v301, %v375
    %v390 = vmul.f32 %v305, %v375
    %v391 = vmul.f32 %v309, %v375
    %v392 = vmul.f32 %v313, %v375
    %v393 = vmul.f32 %v317, %v375
    %v394 = vmul.f32 %v321, %v375
    %v395 = vmul.f32 %v325, %v375
    %v396 = vmul.f32 %v329, %v375
    %v397 = vmul.f32 %v333, %v375
    %v398 = vmul.f32 %v337, %v375
    %v399 = vmul.f32 %v341, %v375
    %v400 = vmul.f32 %v345, %v375
    %v401 = vmul.f32 %v349, %v375
    %v402 = vmul.f32 %v353, %v375
    %v403 = vmul.f32 %v357, %v375
    %v404 = vmul.f32 %v361, %v375
    %v405 = vmul.f32 %v365, %v375
    %v406 = vmul.f32 %v369, %v375
    %v407 = vmul.f32 %v373, %v375
    %v408 = vadd.f32 %v215, %v376
    %v409 = vadd.f32 %v216, %v377
    %v410 = vadd.f32 %v217, %v378
    %v411 = vadd.f32 %v218, %v379
    %v412 = vadd.f32 %v219, %v380
    %v413 = vadd.f32 %v220, %v381
    %v414 = vadd.f32 %v221, %v382
    %v415 = vadd.f32 %v222, %v383
    %v416 = vadd.f32 %v223, %v384
    %v417 = vadd.f32 %v224, %v385
    %v418 = vadd.f32 %v225, %v386
    %v419 = vadd.f32 %v226, %v387
    %v420 = vadd.f32 %v227, %v388
    %v421 = vadd.f32 %v228, %v389
    %v422 = vadd.f32 %v229, %v390
    %v423 = vadd.f32 %v230, %v391
    %v424 = vadd.f32 %v231, %v392
    %v425 = vadd.f32 %v232, %v393
    %v426 = vadd.f32 %v233, %v394
    %v427 = vadd.f32 %v234, %v395
    %v428 = vadd.f32 %v235, %v396
    %v429 = vadd.f32 %v236, %v397
    %v430 = vadd.f32 %v237, %v398
    %v431 = vadd.f32 %v238, %v399
    %v432 = vadd.f32 %v239, %v400
    %v433 = vadd.f32 %v240, %v401
    %v434 = vadd.f32 %v241, %v402
    %v435 = vadd.f32 %v242, %v403
    %v436 = vadd.f32 %v243, %v404
    %v437 = vadd.f32 %v244, %v405
    %v438 = vadd.f32 %v245, %v406
    %v439 = vadd.f32 %v246, %v407
    %440 = vset.pattern.permute.xlu0 2
    %441 = vperm.xlu0 %440, %v22
    %v442 = vpop.permute.xlu0 %441
    %444 = vset.pattern.permute.xlu0 2
    %445 = vperm.xlu0 %444, %v23
    %v446 = vpop.permute.xlu0 %445
    %448 = vset.pattern.permute.xlu0 2
    %449 = vperm.xlu0 %448, %v24
    %v450 = vpop.permute.xlu0 %449
    %452 = vset.pattern.permute.xlu0 2
    %453 = vperm.xlu0 %452, %v25
    %v454 = vpop.permute.xlu0 %453
    %456 = vset.pattern.permute.xlu0 2
    %457 = vperm.xlu0 %456, %v26
    %v458 = vpop.permute.xlu0 %457
    %460 = vset.pattern.permute.xlu0 2
    %461 = vperm.xlu0 %460, %v27
    %v462 = vpop.permute.xlu0 %461
    %464 = vset.pattern.permute.xlu0 2
    %465 = vperm.xlu0 %464, %v28
    %v466 = vpop.permute.xlu0 %465
    %468 = vset.pattern.permute.xlu0 2
    %469 = vperm.xlu0 %468, %v29
    %v470 = vpop.permute.xlu0 %469
    %472 = vset.pattern.permute.xlu0 2
    %473 = vperm.xlu0 %472, %v30
    %v474 = vpop.permute.xlu0 %473
    %476 = vset.pattern.permute.xlu0 2
    %477 = vperm.xlu0 %476, %v31
    %v478 = vpop.permute.xlu0 %477
    %480 = vset.pattern.permute.xlu0 2
    %481 = vperm.xlu0 %480, %v32
    %v482 = vpop.permute.xlu0 %481
    %484 = vset.pattern.permute.xlu0 2
    %485 = vperm.xlu0 %484, %v33
    %v486 = vpop.permute.xlu0 %485
    %488 = vset.pattern.permute.xlu0 2
    %489 = vperm.xlu0 %488, %v34
    %v490 = vpop.permute.xlu0 %489
    %492 = vset.pattern.permute.xlu0 2
    %493 = vperm.xlu0 %492, %v35
    %v494 = vpop.permute.xlu0 %493
    %496 = vset.pattern.permute.xlu0 2
    %497 = vperm.xlu0 %496, %v36
    %v498 = vpop.permute.xlu0 %497
    %500 = vset.pattern.permute.xlu0 2
    %501 = vperm.xlu0 %500, %v37
    %v502 = vpop.permute.xlu0 %501
    %504 = vset.pattern.permute.xlu0 2
    %505 = vperm.xlu0 %504, %v38
    %v506 = vpop.permute.xlu0 %505
    %508 = vset.pattern.permute.xlu0 2
    %509 = vperm.xlu0 %508, %v39
    %v510 = vpop.permute.xlu0 %509
    %512 = vset.pattern.permute.xlu0 2
    %513 = vperm.xlu0 %512, %v40
    %v514 = vpop.permute.xlu0 %513
    %516 = vset.pattern.permute.xlu0 2
    %517 = vperm.xlu0 %516, %v41
    %v518 = vpop.permute.xlu0 %517
    %520 = vset.pattern.permute.xlu0 2
    %521 = vperm.xlu0 %520, %v42
    %v522 = vpop.permute.xlu0 %521
    %524 = vset.pattern.permute.xlu0 2
    %525 = vperm.xlu0 %524, %v43
    %v526 = vpop.permute.xlu0 %525
    %528 = vset.pattern.permute.xlu0 2
    %529 = vperm.xlu0 %528, %v44
    %v530 = vpop.permute.xlu0 %529
    %532 = vset.pattern.permute.xlu0 2
    %533 = vperm.xlu0 %532, %v45
    %v534 = vpop.permute.xlu0 %533
    %536 = vset.pattern.permute.xlu0 2
    %537 = vperm.xlu0 %536, %v46
    %v538 = vpop.permute.xlu0 %537
    %540 = vset.pattern.permute.xlu0 2
    %541 = vperm.xlu0 %540, %v47
    %v542 = vpop.permute.xlu0 %541
    %544 = vset.pattern.permute.xlu0 2
    %545 = vperm.xlu0 %544, %v48
    %v546 = vpop.permute.xlu0 %545
    %548 = vset.pattern.permute.xlu0 2
    %549 = vperm.xlu0 %548, %v49
    %v550 = vpop.permute.xlu0 %549
    %552 = vset.pattern.permute.xlu0 2
    %553 = vperm.xlu0 %552, %v50
    %v554 = vpop.permute.xlu0 %553
    %556 = vset.pattern.permute.xlu0 2
    %557 = vperm.xlu0 %556, %v51
    %v558 = vpop.permute.xlu0 %557
    %560 = vset.pattern.permute.xlu0 2
    %561 = vperm.xlu0 %560, %v52
    %v562 = vpop.permute.xlu0 %561
    %564 = vset.pattern.permute.xlu0 2
    %565 = vperm.xlu0 %564, %v53
    %v566 = vpop.permute.xlu0 %565
    %v568 = vperm.slane %v21, 2
    %v569 = vmul.f32 %v442, %v568
    %v570 = vmul.f32 %v446, %v568
    %v571 = vmul.f32 %v450, %v568
    %v572 = vmul.f32 %v454, %v568
    %v573 = vmul.f32 %v458, %v568
    %v574 = vmul.f32 %v462, %v568
    %v575 = vmul.f32 %v466, %v568
    %v576 = vmul.f32 %v470, %v568
    %v577 = vmul.f32 %v474, %v568
    %v578 = vmul.f32 %v478, %v568
    %v579 = vmul.f32 %v482, %v568
    %v580 = vmul.f32 %v486, %v568
    %v581 = vmul.f32 %v490, %v568
    %v582 = vmul.f32 %v494, %v568
    %v583 = vmul.f32 %v498, %v568
    %v584 = vmul.f32 %v502, %v568
    %v585 = vmul.f32 %v506, %v568
    %v586 = vmul.f32 %v510, %v568
    %v587 = vmul.f32 %v514, %v568
    %v588 = vmul.f32 %v518, %v568
    %v589 = vmul.f32 %v522, %v568
    %v590 = vmul.f32 %v526, %v568
    %v591 = vmul.f32 %v530, %v568
    %v592 = vmul.f32 %v534, %v568
    %v593 = vmul.f32 %v538, %v568
    %v594 = vmul.f32 %v542, %v568
    %v595 = vmul.f32 %v546, %v568
    %v596 = vmul.f32 %v550, %v568
    %v597 = vmul.f32 %v554, %v568
    %v598 = vmul.f32 %v558, %v568
    %v599 = vmul.f32 %v562, %v568
    %v600 = vmul.f32 %v566, %v568
    %v601 = vadd.f32 %v408, %v569
    %v602 = vadd.f32 %v409, %v570
    %v603 = vadd.f32 %v410, %v571
    %v604 = vadd.f32 %v411, %v572
    %v605 = vadd.f32 %v412, %v573
    %v606 = vadd.f32 %v413, %v574
    %v607 = vadd.f32 %v414, %v575
    %v608 = vadd.f32 %v415, %v576
    %v609 = vadd.f32 %v416, %v577
    %v610 = vadd.f32 %v417, %v578
    %v611 = vadd.f32 %v418, %v579
    %v612 = vadd.f32 %v419, %v580
    %v613 = vadd.f32 %v420, %v581
    %v614 = vadd.f32 %v421, %v582
    %v615 = vadd.f32 %v422, %v583
    %v616 = vadd.f32 %v423, %v584
    %v617 = vadd.f32 %v424, %v585
    %v618 = vadd.f32 %v425, %v586
    %v619 = vadd.f32 %v426, %v587
    %v620 = vadd.f32 %v427, %v588
    %v621 = vadd.f32 %v428, %v589
    %v622 = vadd.f32 %v429, %v590
    %v623 = vadd.f32 %v430, %v591
    %v624 = vadd.f32 %v431, %v592
    %v625 = vadd.f32 %v432, %v593
    %v626 = vadd.f32 %v433, %v594
    %v627 = vadd.f32 %v434, %v595
    %v628 = vadd.f32 %v435, %v596
    %v629 = vadd.f32 %v436, %v597
    %v630 = vadd.f32 %v437, %v598
    %v631 = vadd.f32 %v438, %v599
    %v632 = vadd.f32 %v439, %v600
    %v633 = vld [vmem:[%s2] sm:$0xff]
    %v634 = vld [vmem:[%s2 + $0x8] sm:$0xff]
    %v635 = vld [vmem:[%s2 + $0x10] sm:$0xff]
    %v636 = vld [vmem:[%s2 + $0x18] sm:$0xff]
    %v637 = vld [vmem:[%s2 + $0x20] sm:$0xff]
    %v638 = vld [vmem:[%s2 + $0x28] sm:$0xff]
    %v639 = vld [vmem:[%s2 + $0x30] sm:$0xff]
    %v640 = vld [vmem:[%s2 + $0x38] sm:$0xff]
    %v641 = vld [vmem:[%s2 + $0x40] sm:$0xff]
    %v642 = vld [vmem:[%s2 + $0x48] sm:$0xff]
    %v643 = vld [vmem:[%s2 + $0x50] sm:$0xff]
    %v644 = vld [vmem:[%s2 + $0x58] sm:$0xff]
    %v645 = vld [vmem:[%s2 + $0x60] sm:$0xff]
    %v646 = vld [vmem:[%s2 + $0x68] sm:$0xff]
    %v647 = vld [vmem:[%s2 + $0x70] sm:$0xff]
    %v648 = vld [vmem:[%s2 + $0x78] sm:$0xff]
    %v649 = vld [vmem:[%s2 + $0x80] sm:$0xff]
    %v650 = vld [vmem:[%s2 + $0x88] sm:$0xff]
    %v651 = vld [vmem:[%s2 + $0x90] sm:$0xff]
    %v652 = vld [vmem:[%s2 + $0x98] sm:$0xff]
    %v653 = vld [vmem:[%s2 + $0xa0] sm:$0xff]
    %v654 = vld [vmem:[%s2 + $0xa8] sm:$0xff]
    %v655 = vld [vmem:[%s2 + $0xb0] sm:$0xff]
    %v656 = vld [vmem:[%s2 + $0xb8] sm:$0xff]
    %v657 = vld [vmem:[%s2 + $0xc0] sm:$0xff]
    %v658 = vld [vmem:[%s2 + $0xc8] sm:$0xff]
    %v659 = vld [vmem:[%s2 + $0xd0] sm:$0xff]
    %v660 = vld [vmem:[%s2 + $0xd8] sm:$0xff]
    %v661 = vld [vmem:[%s2 + $0xe0] sm:$0xff]
    %v662 = vld [vmem:[%s2 + $0xe8] sm:$0xff]
    %v663 = vld [vmem:[%s2 + $0xf0] sm:$0xff]
    %v664 = vld [vmem:[%s2 + $0xf8] sm:$0xff]
    %666 = vset.pattern.permute.xlu0 0
    %667 = vperm.xlu0 %666, %v633
    %v668 = vpop.permute.xlu0 %667
    %671 = vset.pattern.permute.xlu0 0
    %672 = vperm.xlu0 %671, %v634
    %v673 = vpop.permute.xlu0 %672
    %676 = vset.pattern.permute.xlu0 0
    %677 = vperm.xlu0 %676, %v635
    %v678 = vpop.permute.xlu0 %677
    %681 = vset.pattern.permute.xlu0 0
    %682 = vperm.xlu0 %681, %v636
    %v683 = vpop.permute.xlu0 %682
    %686 = vset.pattern.permute.xlu0 0
    %687 = vperm.xlu0 %686, %v637
    %v688 = vpop.permute.xlu0 %687
    %691 = vset.pattern.permute.xlu0 0
    %692 = vperm.xlu0 %691, %v638
    %v693 = vpop.permute.xlu0 %692
    %696 = vset.pattern.permute.xlu0 0
    %697 = vperm.xlu0 %696, %v639
    %v698 = vpop.permute.xlu0 %697
    %701 = vset.pattern.permute.xlu0 0
    %702 = vperm.xlu0 %701, %v640
    %v703 = vpop.permute.xlu0 %702
    %706 = vset.pattern.permute.xlu0 0
    %707 = vperm.xlu0 %706, %v641
    %v708 = vpop.permute.xlu0 %707
    %711 = vset.pattern.permute.xlu0 0
    %712 = vperm.xlu0 %711, %v642
    %v713 = vpop.permute.xlu0 %712
    %716 = vset.pattern.permute.xlu0 0
    %717 = vperm.xlu0 %716, %v643
    %v718 = vpop.permute.xlu0 %717
    %721 = vset.pattern.permute.xlu0 0
    %722 = vperm.xlu0 %721, %v644
    %v723 = vpop.permute.xlu0 %722
    %726 = vset.pattern.permute.xlu0 0
    %727 = vperm.xlu0 %726, %v645
    %v728 = vpop.permute.xlu0 %727
    %731 = vset.pattern.permute.xlu0 0
    %732 = vperm.xlu0 %731, %v646
    %v733 = vpop.permute.xlu0 %732
    %736 = vset.pattern.permute.xlu0 0
    %737 = vperm.xlu0 %736, %v647
    %v738 = vpop.permute.xlu0 %737
    %741 = vset.pattern.permute.xlu0 0
    %742 = vperm.xlu0 %741, %v648
    %v743 = vpop.permute.xlu0 %742
    %746 = vset.pattern.permute.xlu0 0
    %747 = vperm.xlu0 %746, %v649
    %v748 = vpop.permute.xlu0 %747
    %751 = vset.pattern.permute.xlu0 0
    %752 = vperm.xlu0 %751, %v650
    %v753 = vpop.permute.xlu0 %752
    %756 = vset.pattern.permute.xlu0 0
    %757 = vperm.xlu0 %756, %v651
    %v758 = vpop.permute.xlu0 %757
    %761 = vset.pattern.permute.xlu0 0
    %762 = vperm.xlu0 %761, %v652
    %v763 = vpop.permute.xlu0 %762
    %766 = vset.pattern.permute.xlu0 0
    %767 = vperm.xlu0 %766, %v653
    %v768 = vpop.permute.xlu0 %767
    %771 = vset.pattern.permute.xlu0 0
    %772 = vperm.xlu0 %771, %v654
    %v773 = vpop.permute.xlu0 %772
    %776 = vset.pattern.permute.xlu0 0
    %777 = vperm.xlu0 %776, %v655
    %v778 = vpop.permute.xlu0 %777
    %781 = vset.pattern.permute.xlu0 0
    %782 = vperm.xlu0 %781, %v656
    %v783 = vpop.permute.xlu0 %782
    %786 = vset.pattern.permute.xlu0 0
    %787 = vperm.xlu0 %786, %v657
    %v788 = vpop.permute.xlu0 %787
    %791 = vset.pattern.permute.xlu0 0
    %792 = vperm.xlu0 %791, %v658
    %v793 = vpop.permute.xlu0 %792
    %796 = vset.pattern.permute.xlu0 0
    %797 = vperm.xlu0 %796, %v659
    %v798 = vpop.permute.xlu0 %797
    %801 = vset.pattern.permute.xlu0 0
    %802 = vperm.xlu0 %801, %v660
    %v803 = vpop.permute.xlu0 %802
    %806 = vset.pattern.permute.xlu0 0
    %807 = vperm.xlu0 %806, %v661
    %v808 = vpop.permute.xlu0 %807
    %811 = vset.pattern.permute.xlu0 0
    %812 = vperm.xlu0 %811, %v662
    %v813 = vpop.permute.xlu0 %812
    %816 = vset.pattern.permute.xlu0 0
    %817 = vperm.xlu0 %816, %v663
    %v818 = vpop.permute.xlu0 %817
    %821 = vset.pattern.permute.xlu0 0
    %822 = vperm.xlu0 %821, %v664
    %v823 = vpop.permute.xlu0 %822
    %v825 = vadd.f32 %v601, %v668
    %v826 = vadd.f32 %v602, %v673
    %v827 = vadd.f32 %v603, %v678
    %v828 = vadd.f32 %v604, %v683
    %v829 = vadd.f32 %v605, %v688
    %v830 = vadd.f32 %v606, %v693
    %v831 = vadd.f32 %v607, %v698
    %v832 = vadd.f32 %v608, %v703
    %v833 = vadd.f32 %v609, %v708
    %v834 = vadd.f32 %v610, %v713
    %v835 = vadd.f32 %v611, %v718
    %v836 = vadd.f32 %v612, %v723
    %v837 = vadd.f32 %v613, %v728
    %v838 = vadd.f32 %v614, %v733
    %v839 = vadd.f32 %v615, %v738
    %v840 = vadd.f32 %v616, %v743
    %v841 = vadd.f32 %v617, %v748
    %v842 = vadd.f32 %v618, %v753
    %v843 = vadd.f32 %v619, %v758
    %v844 = vadd.f32 %v620, %v763
    %v845 = vadd.f32 %v621, %v768
    %v846 = vadd.f32 %v622, %v773
    %v847 = vadd.f32 %v623, %v778
    %v848 = vadd.f32 %v624, %v783
    %v849 = vadd.f32 %v625, %v788
    %v850 = vadd.f32 %v626, %v793
    %v851 = vadd.f32 %v627, %v798
    %v852 = vadd.f32 %v628, %v803
    %v853 = vadd.f32 %v629, %v808
    %v854 = vadd.f32 %v630, %v813
    %v855 = vadd.f32 %v631, %v818
    %v856 = vadd.f32 %v632, %v823
    %v857 = vmax.f32 %v825, 0.0
    %v858 = vmax.f32 %v826, 0.0
    %v859 = vmax.f32 %v827, 0.0
    %v860 = vmax.f32 %v828, 0.0
    %v861 = vmax.f32 %v829, 0.0
    %v862 = vmax.f32 %v830, 0.0
    %v863 = vmax.f32 %v831, 0.0
    %v864 = vmax.f32 %v832, 0.0
    %v865 = vmax.f32 %v833, 0.0
    %v866 = vmax.f32 %v834, 0.0
    %v867 = vmax.f32 %v835, 0.0
    %v868 = vmax.f32 %v836, 0.0
    %v869 = vmax.f32 %v837, 0.0
    %v870 = vmax.f32 %v838, 0.0
    %v871 = vmax.f32 %v839, 0.0
    %v872 = vmax.f32 %v840, 0.0
    %v873 = vmax.f32 %v841, 0.0
    %v874 = vmax.f32 %v842, 0.0
    %v875 = vmax.f32 %v843, 0.0
    %v876 = vmax.f32 %v844, 0.0
    %v877 = vmax.f32 %v845, 0.0
    %v878 = vmax.f32 %v846, 0.0
    %v879 = vmax.f32 %v847, 0.0
    %v880 = vmax.f32 %v848, 0.0
    %v881 = vmax.f32 %v849, 0.0
    %v882 = vmax.f32 %v850, 0.0
    %v883 = vmax.f32 %v851, 0.0
    %v884 = vmax.f32 %v852, 0.0
    %v885 = vmax.f32 %v853, 0.0
    %v886 = vmax.f32 %v854, 0.0
    %v887 = vmax.f32 %v855, 0.0
    %v888 = vmax.f32 %v856, 0.0
    %v889 = vld [vmem:[%s3] sm:$0xff]
    %v890 = vld [vmem:[%s3 + $0x8] sm:$0xff]
    %v891 = vpack.c.bf16 %v858, %v857
    %v892 = vpack.c.bf16 %v860, %v859
    %v893 = vpack.c.bf16 %v862, %v861
    %v894 = vpack.c.bf16 %v864, %v863
    %v895 = vpack.c.bf16 %v866, %v865
    %v896 = vpack.c.bf16 %v868, %v867
    %v897 = vpack.c.bf16 %v870, %v869
    %v898 = vpack.c.bf16 %v872, %v871
    %v899 = vpack.c.bf16 %v874, %v873
    %v900 = vpack.c.bf16 %v876, %v875
    %v901 = vpack.c.bf16 %v878, %v877
    %v902 = vpack.c.bf16 %v880, %v879
    %v903 = vpack.c.bf16 %v882, %v881
    %v904 = vpack.c.bf16 %v884, %v883
    %v905 = vpack.c.bf16 %v886, %v885
    %v906 = vpack.c.bf16 %v888, %v887
    %v907 = vld [vmem:[%s4] sm:$0xff]
    %v908 = vld [vmem:[%s4 + $0x8] sm:$0xff]
    %910 = vset.pattern.permute.xlu0 0
    %911 = vperm.xlu0 %910, %v907
    %v912 = vpop.permute.xlu0 %911
    %915 = vset.pattern.permute.xlu0 0
    %916 = vperm.xlu0 %915, %v908
    %v917 = vpop.permute.xlu0 %916
    %v921 = vunpack.c.l.b16 %v889
    %v922 = vunpack.c.h.b16 %v889
    %v923 = vunpack.c.l.b16 %v890
    %v924 = vunpack.c.h.b16 %v890
    %v925 = vpack.c.b16 %v923, %v921
    %v926 = vpack.c.b16 %v924, %v922
    %929 = vmatpush.bf16.msra.mxu0 %v898
    %930 = vmatpush.bf16.msra.mxu0 %v897
    %931 = vmatpush.bf16.msra.mxu0 %v896
    %932 = vmatpush.bf16.msra.mxu0 %v895
    %933 = vmatpush.bf16.msra.mxu0 %v894
    %934 = vmatpush.bf16.msra.mxu0 %v893
    %935 = vmatpush.bf16.msra.mxu0 %v892
    %936 = vmatpush.bf16.msra.mxu0 %v891
    %937 = vmatmul.bf16.gmra.mxu0 %v925
    %v938 = vpop.f32.mrf.mxu0
    %v939 = vadd.f32 %v912, %v938
    %v940 = vpop.f32.mrf.mxu0
    %v941 = vadd.f32 %v917, %v940
    %942 = vdwg.mxu0
    %943 = vmatpush.bf16.msra.mxu0 %v906
    %944 = vmatpush.bf16.msra.mxu0 %v905
    %945 = vmatpush.bf16.msra.mxu0 %v904
    %946 = vmatpush.bf16.msra.mxu0 %v903
    %947 = vmatpush.bf16.msra.mxu0 %v902
    %948 = vmatpush.bf16.msra.mxu0 %v901
    %949 = vmatpush.bf16.msra.mxu0 %v900
    %950 = vmatpush.bf16.msra.mxu0 %v899
    %951 = vmatmul.bf16.gmra.mxu0 %v926
    %v952 = vpop.f32.mrf.mxu0
    %v953 = vadd.f32 %v939, %v952
    %v954 = vpop.f32.mrf.mxu0
    %v955 = vadd.f32 %v941, %v954
    %956 = vdwg.mxu0
    %v957 = vlaneseq
    %v958 = vshrl.u32 %v957, 7
    %v959 = vadd.s32 %v958, 8
    %vm960 = vcmp.lt.s32.totalorder %v958, 12
    %vm961 = vcmp.lt.s32.totalorder %v959, 12
    %v962 = vsel %vm960, %v953, -inf
    %v963 = vsel %vm961, %v955, -inf
    %v964 = vmax.f32 %v962, %v963
    %v965 = vrot.slane %v964, 4
    %v966 = vmax.f32 %v964, %v965
    %v967 = vrot.slane %v966, 2
    %v968 = vmax.f32 %v966, %v967
    %v969 = vrot.slane %v968, 1
    %v970 = vmax.f32 %v968, %v969
    %v971 = vsub.f32 %v962, %v970
    %v972 = vsub.f32 %v963, %v970
    %v973 = vmul.f32 %v971, 1.442695
    %v974 = vpow.pop %v973
    %v975 = vmul.f32 %v972, 1.442695
    %v976 = vpow.pop %v975
    %v977 = vadd.f32 %v974, %v976
    %v978 = vrot.slane %v977, 4
    %v979 = vadd.f32 %v977, %v978
    %v980 = vrot.slane %v979, 2
    %v981 = vadd.f32 %v979, %v980
    %v982 = vrot.slane %v981, 1
    %v983 = vadd.f32 %v981, %v982
    %v984 = vrcp.pop %v983
    %v985 = vmul.f32 %v974, %v984
    %v986 = vmul.f32 %v976, %v984
    %987 = vst [vmem:[#allocation2] sm:$0xff] %v985
    %988 = vst [vmem:[#allocation2 + $0x8] sm:$0xff] %v986
    // Predicated region
    $region22: #{tpu_custom_call.1} parent=1 // pred_check
      _
    $region23: #{tpu_custom_call.1} parent=1 // pred_check_branch
      %990 = sbr.rel (0) target = $region25
    $region24: #{tpu_custom_call.1} parent=1 // pred_region
      %992 = vsyncadd [#allocation3], 0
      %s993 = sshll.u32 [#allocation2], 4
      %s994 = int_to_ptr.vmem [resolvable:$true] %s993
      %s995 = sshll.u32 %s5, 4
      %s996 = int_to_ptr.hbm [resolvable:$true] %s995
      %1001 = dma.vmem_to_hbm [thread:$0]  %s994, 256, %s996, [#allocation3], 128, 128, 8
    $region25: #{tpu_custom_call.1} parent=1 // pred_fallthru
      _
    // Predicated region
    $region26: #{tpu_custom_call.1} parent=1 // pred_check
      _
    $region27: #{tpu_custom_call.1} parent=1 // pred_check_branch
      %1003 = sbr.rel (0) target = $region29
    $region28: #{tpu_custom_call.1} parent=1 // pred_region
      %1005 = dma.done [#allocation3], 256
    $region29: #{tpu_custom_call.1} parent=1 // pred_fallthru
      _
    %1006 = vsyncpa [#allocation3], 1

</llo_original>
